<compile_context>
chip_gen: v6e
topology: v6e:2x2x1
jax: 0.10.0
libtpu: 0.0.40
codegen_flags: <defaults>
</compile_context>

<pallas_src>
import functools

import jax
import jax.numpy as jnp
from jax.experimental import pallas as pl
from jax.experimental.pallas import tpu as pltpu

_EPS = 1e-5  # torch.nn.LayerNorm default


# ----------------------------- kernels --------------------------------------


def _transpose_kernel(x_ref, o_ref):
    # x_ref: (1, C, THW)  ->  o_ref: (1, THW, C)
    o_ref[0] = x_ref[0].T


def _norm_transpose_kernel(x_ref, g_ref, b_ref, o_ref):
    # x_ref: (1, C, THW), g_ref/b_ref: (C, 1), o_ref: (1, THW, C)
    x = x_ref[0].astype(jnp.float32)                 # (C, THW): THW on lanes
    c = x.shape[0]
    inv_c = 1.0 / c
    # One combined reduction pass over the tile (sublane reduce over C).
    s = jnp.sum(x, axis=0, keepdims=True)            # (1, THW)
    ss = jnp.sum(x * x, axis=0, keepdims=True)       # (1, THW)
    mean = s * inv_c
    var = ss * inv_c - mean * mean                   # biased variance (matches torch)
    inv = jax.lax.rsqrt(var + _EPS)                  # (1, THW)  (EUP)
    g = g_ref[...].astype(jnp.float32)               # (C, 1)
    b = b_ref[...].astype(jnp.float32)               # (C, 1)
    y = (x - mean) * inv * g + b                     # (C, THW): lane-dense VPU work
    # Cast first (half the data for bf16 outputs), transpose once at the end.
    o_ref[0] = y.astype(o_ref.dtype).T               # (THW, C)


# ----------------------------- wrapper ---------------------------------------


def _pick_spatial_tile(hw, c, itemsize):
    """Largest multiple-of-128 tile that divides HW and keeps blocks modest."""
    if hw % 128 != 0:
        # Full-dim escape hatch for small / ragged spatial sizes.
        return hw
    # ~2 MiB per input block: double-buffered in+out + f32 temps stay well
    # under the scoped VMEM limit even on v7x (32 MiB default of 64 MiB).
    budget_elems = (2 * 1024 * 1024) // max(1, itemsize)
    max_tile = max(128, min(hw, (budget_elems // max(1, c)) // 128 * 128))
    t = (max_tile // 128) * 128
    while t >= 128:
        if hw % t == 0:
            return t
        t -= 128
    return hw


@functools.partial(jax.jit, static_argnames=("use_norm", "tile_hw"))
def patch_embed(x, gamma=None, beta=None, *, use_norm=False, tile_hw=None):
    """x: (B, C, H, W) -> (B, H*W, C).  Optional LayerNorm over C."""
    B, C, H, W = x.shape
    HW = H * W
    x_flat = x.reshape(B, C, HW)  # flatten(2); pure layout glue

    thw = tile_hw if tile_hw is not None else _pick_spatial_tile(HW, C, x.dtype.itemsize)
    assert HW % thw == 0, "spatial tile must divide H*W"
    n_t = HW // thw

    out_shape = jax.ShapeDtypeStruct((B, HW, C), x.dtype)
    x_spec = pl.BlockSpec((1, C, thw), lambda b, t: (b, 0, t))
    o_spec = pl.BlockSpec((1, thw, C), lambda b, t: (b, t, 0))
    cparams = pltpu.CompilerParams(dimension_semantics=("parallel", "parallel"))
    nbytes = x.dtype.itemsize
    cost = pl.CostEstimate(
        flops=(8 * B * HW * C) if use_norm else 0,
        transcendentals=(B * HW) if use_norm else 0,
        bytes_accessed=2 * B * C * HW * nbytes,   # pure-bandwidth op
    )

    if not use_norm:
        # NOTE: a bare transpose is HBM-roofline-bound; in a full model this is
        # best fused into the consumer.  Kept as a tiled Pallas kernel here.
        return pl.pallas_call(
            _transpose_kernel,
            out_shape=out_shape,
            grid=(B, n_t),
            in_specs=[x_spec],
            out_specs=o_spec,
            compiler_params=cparams,
            cost_estimate=cost,
        )(x_flat)

    if gamma is None or beta is None:
        raise ValueError("use_norm=True requires gamma and beta")
    g = gamma.reshape(C, 1)
    b = beta.reshape(C, 1)
    p_spec = pl.BlockSpec((C, 1), lambda b_, t: (0, 0))  # resident across grid
    return pl.pallas_call(
        _norm_transpose_kernel,
        out_shape=out_shape,
        grid=(B, n_t),
        in_specs=[x_spec, p_spec, p_spec],
        out_specs=o_spec,
        compiler_params=cparams,
        cost_estimate=cost,
    )(x_flat, g, b)


# ----------------------------- reference & test -------------------------------


def _ref_forward(x, gamma=None, beta=None):
    """Pure-JAX reference matching the PyTorch forward."""
    B, C, H, W = x.shape
    y = jnp.transpose(x.reshape(B, C, H * W), (0, 2, 1))
    if gamma is not None:
        xf = y.astype(jnp.float32)
        mean = jnp.mean(xf, axis=-1, keepdims=True)
        var = jnp.mean((xf - mean) ** 2, axis=-1, keepdims=True)
        y = ((xf - mean) * jax.lax.rsqrt(var + _EPS) * gamma + beta).astype(x.dtype)
    return y


if __name__ == "__main__":
    key = jax.random.PRNGKey(0)
    k_x, k_g, k_b = jax.random.split(key, 3)

    B, C, H, W = 2, 32, 16, 16          # embed_dim = C = 32, img 16x16
    HW = H * W
    x = jax.random.normal(k_x, (B, C, H, W), dtype=jnp.float32)
    gamma = jax.random.normal(k_g, (C,), dtype=jnp.float32)
    beta = jax.random.normal(k_b, (C,), dtype=jnp.float32)
    ref = _ref_forward(x)
    ref_n = _ref_forward(x, gamma, beta)

    # --- norm_layer=None: pure flatten+transpose (auto tile + forced 2-tile) --
    out = patch_embed(x, use_norm=False)
    jax.block_until_ready(out)
    assert out.shape == (B, HW, C)
    assert jnp.allclose(out, ref), "transpose path mismatch"

    out_t = patch_embed(x, use_norm=False, tile_hw=128)   # exercise HW tiling
    jax.block_until_ready(out_t)
    assert jnp.allclose(out_t, ref), "tiled transpose path mismatch"

    # --- norm_layer=nn.LayerNorm path ------------------------------------------
    out_n = patch_embed(x, gamma, beta, use_norm=True)
    jax.block_until_ready(out_n)
    assert jnp.allclose(out_n, ref_n, atol=1e-4, rtol=1e-4), "layernorm path mismatch"

    out_nt = patch_embed(x, gamma, beta, use_norm=True, tile_hw=128)  # tiled norm
    jax.block_until_ready(out_nt)
    assert jnp.allclose(out_nt, ref_n, atol=1e-4, rtol=1e-4), "tiled layernorm mismatch"

    print("KERNEL_OK")
</pallas_src>

<mosaic_0001>
module attributes {stable_mosaic.version = 11 : i64} {
  func.func @_transpose_kernel(%arg0: i32, %arg1: i32, %arg2: memref<1x32x256xf32, #tpu.memory_space<vmem>>, %arg3: memref<1x256x32xf32, #tpu.memory_space<vmem>>) attributes {dimension_semantics = [#tpu.dimension_semantics<parallel>, #tpu.dimension_semantics<parallel>], iteration_bounds = array<i64: 2, 1>, scalar_prefetch = 0 : i64, scratch_operands = 0 : i64, tpu.core_type = #tpu.core_type<tc>, window_params = [{transform_indices = @transform_0, window_bounds = array<i64: 1, 32, 256>}, {transform_indices = @transform_1, window_bounds = array<i64: 1, 256, 32>}]} {
    %c0 = arith.constant 0 : index
    %c0_0 = arith.constant 0 : index
    %c0_1 = arith.constant 0 : index
    %0 = vector.load %arg2[%c0, %c0_0, %c0_1] : memref<1x32x256xf32, #tpu.memory_space<vmem>>, vector<1x32x256xf32>
    %1 = vector.shape_cast %0 : vector<1x32x256xf32> to vector<32x256xf32>
    %2 = tpu.transpose %1, [1, 0] : vector<32x256xf32> -> vector<256x32xf32>
    %c0_2 = arith.constant 0 : index
    %c0_3 = arith.constant 0 : index
    %c0_4 = arith.constant 0 : index
    %3 = vector.load %arg3[%c0_2, %c0_3, %c0_4] : memref<1x256x32xf32, #tpu.memory_space<vmem>>, vector<1x256x32xf32>
    %4 = vector.shape_cast %3 : vector<1x256x32xf32> to vector<256x32xf32>
    %5 = vector.shape_cast %2 : vector<256x32xf32> to vector<1x256x32xf32>
    tpu.vector_store %arg3[%c0_2, %c0_3, %c0_4], %5 {strides = array<i32>} : memref<1x256x32xf32, #tpu.memory_space<vmem>>, vector<1x256x32xf32>,
    return
  }
  func.func @transform_0(%arg0: i32, %arg1: i32) -> (i32, i32, i32) {
    %c0_i32 = arith.constant 0 : i32
    %c0_i32_0 = arith.constant 0 : i32
    return %arg0, %c0_i32, %arg1 : i32, i32, i32
  }
  func.func @transform_1(%arg0: i32, %arg1: i32) -> (i32, i32, i32) {
    %c0_i32 = arith.constant 0 : i32
    %c0_i32_0 = arith.constant 0 : i32
    return %arg0, %arg1, %c0_i32 : i32, i32, i32
  }
}

</mosaic_0001>

<llo_original>
// kernel: patch_embed.1
$region0: #{patch_embed.1}
  #allocation0 [shape = 'u32[]', space=smem, size = 0x4, offset = 0x4, fixed_abs, tag = 'smem constant byte address 0x4 - core index']
  #allocation1 [shape = 'u32[144,128]{1,0:T(1,128)}', space=vmem, size = 0x12000, scoped, tag = 'internal scratch']
  %s0 = inlined_call_operand.vmem [shape: f32[2,32,256], index: 0, kind: input, shape index: {}]
  %s1 = inlined_call_operand.vmem [shape: f32[2,256,32], index: 1, kind: output, shape index: {}]
  %s2 = sld [smem:[#allocation0]]
  $region37: #{patch_embed.1} parent=0
    _
  %s4 = ssub.s32 1, %s2
  %s5 = scalar_select 0, %s4, %s2
  loop: start=0, step=1, limit=4
  $region2: #{patch_embed.1} parent=0 // loop_pre_header
    _
  $region3: #{patch_embed.1} parent=0 // loop_header
    %s7 = sphi 0, %s11
    %p8 = scmp.ge.s32.totalorder %s7, 4
    %s14 = sphi 0, %s26
    %s15 = sphi 0, %s22
    %s16 = sphi 0, %s14
    %s17 = sphi 0, %s15
    %s18 = sphi 0, %s16
    %s19 = sphi 0, %s17
    %s31 = sphi 0, %s33
    %s34 = sphi 0, %s31
    %s35 = sphi 0, %s34
    %s51 = sphi 0, %s35
    %s59 = sphi 0, %s61
    %s62 = sphi 0, %s59
    %s63 = sphi 0, %s62
    %s79 = sphi 0, %s63
  $region4: #{patch_embed.1} parent=0 // loop_header_branch
    %10 = sbr.rel (%p8) target = $region8
  $region5: #{patch_embed.1} parent=0 // loop_body
    %s12 = ssub.s32 %s7, 1
    %s13 = ssub.s32 %s7, 2
    %s20 = sadd.s32 1, %s15
    %p21 = scmp.ge.s32.totalorder %s20, 1
    %s22 = scalar_select %p21, 0, %s20
    %s23 = sadd.s32 1, %s14
    %s24 = scalar_select %p21, %s23, %s14
    %p25 = scmp.ge.s32.totalorder %s24, 2
    %s26 = scalar_select %p25, 0, %s24
    %s27 = ssub.s32 %s14, %s26
    %s28 = ssub.s32 %s15, %s22
    %s29 = sor.u32 %s27, %s28
    %p30 = scmp.eq.s32.totalorder %s29, 0
    %s32 = sadd.s32 %s31, 1
    %s33 = scalar_select %p30, %s31, %s32
    %p36 = pneg %p30
    %p37 = scmp.eq.s32.totalorder %s7, 1
    %p38 = por %p36, %p37
    %p39 = scmp.ne.s32.totalorder %s31, %s34
    %p40 = scmp.eq.s32.totalorder %s7, 0
    %p41 = por %p39, %p40
    %p42 = scmp.ne.s32.totalorder %s31, %s34
    %p43 = scmp.eq.s32.totalorder %s12, 1
    %p44 = por %p42, %p43
    %p45 = scmp.ne.s32.totalorder %s34, %s35
    %p46 = scmp.eq.s32.totalorder %s12, 0
    %p47 = por %p45, %p46
    %p48 = scmp.ne.s32.totalorder %s34, %s35
    %p49 = scmp.eq.s32.totalorder %s13, 1
    %p50 = por %p48, %p49
    %p52 = scmp.ne.s32.totalorder %s35, %s51
    %p53 = scmp.eq.s32.totalorder %s13, 0
    %p54 = por %p52, %p53
    %s55 = ssub.s32 %s14, %s26
    %s56 = ssub.s32 %s15, %s22
    %s57 = sor.u32 %s55, %s56
    %p58 = scmp.eq.s32.totalorder %s57, 0
    %s60 = sadd.s32 %s59, 1
    %s61 = scalar_select %p58, %s59, %s60
    %p64 = pneg %p58
    %p65 = scmp.eq.s32.totalorder %s7, 1
    %p66 = por %p64, %p65
    %p67 = scmp.ne.s32.totalorder %s59, %s62
    %p68 = scmp.eq.s32.totalorder %s7, 0
    %p69 = por %p67, %p68
    %p70 = scmp.ne.s32.totalorder %s59, %s62
    %p71 = scmp.eq.s32.totalorder %s12, 1
    %p72 = por %p70, %p71
    %p73 = scmp.ne.s32.totalorder %s62, %s63
    %p74 = scmp.eq.s32.totalorder %s12, 0
    %p75 = por %p73, %p74
    %p76 = scmp.ne.s32.totalorder %s62, %s63
    %p77 = scmp.eq.s32.totalorder %s13, 1
    %p78 = por %p76, %p77
    %p80 = scmp.ne.s32.totalorder %s63, %s79
    %p81 = scmp.eq.s32.totalorder %s13, 0
    %p82 = por %p80, %p81
    %p83 = scmp.le.s32.totalorder 1, %s7
    %p84 = scmp.lt.s32.totalorder %s7, 3
    %p85 = pnand %p83, %p84
    %p86 = pneg %p85
    // Predicated region
    $region9: #{patch_embed.1} parent=5 // pred_check
      _
    $region10: #{patch_embed.1} parent=5 // pred_check_branch
      %88 = sbr.rel (%p85) target = $region12
    $region11: #{patch_embed.1} parent=5 // pred_region
      %s89 = ssub.s32 %s7, 1
    $region12: #{patch_embed.1} parent=5 // pred_fallthru
      _
    %p90 = scmp.lt.s32.totalorder %s7, 2
    // Predicated region
    $region13: #{patch_embed.1} parent=5 // pred_check
      %p91 = pneg %p90
    $region14: #{patch_embed.1} parent=5 // pred_check_branch
      %93 = sbr.rel (%p91) target = $region16
    $region15: #{patch_embed.1} parent=5 // pred_region
      // Predicated region
      $region17: #{patch_embed.1} parent=15 // pred_check
        %p94 = pneg %p41
      $region18: #{patch_embed.1} parent=15 // pred_check_branch
        %96 = sbr.rel (%p94) target = $region20
      $region19: #{patch_embed.1} parent=15 // pred_region
        %s97 = smul.u32 2, %s15
        %p98 = scmp.lt.s32.totalorder %s14, 1
        %s99 = scalar_select %p98, %s14, 1
        %p100 = scmp.lt.s32.totalorder %s97, 1
        %s101 = scalar_select %p100, %s97, 1
        %s102 = smul.addr %s99, 8
        %s103 = sadd.s32 %s101, %s102
        %s104 = smul.addr %s103, 8
        %s105 = scalar_lea.vmem %s0, %s104
        %s106 = smul.u32 2, %s15
      $region20: #{patch_embed.1} parent=15 // pred_fallthru
        _
    $region16: #{patch_embed.1} parent=5 // pred_fallthru
      _
    %p107 = scmp.le.s32.totalorder 1, %s7
    %p108 = scmp.lt.s32.totalorder %s7, 3
    %p109 = pnand %p107, %p108
    %p110 = pneg %p109
    // Predicated region
    $region21: #{patch_embed.1} parent=5 // pred_check
      _
    $region22: #{patch_embed.1} parent=5 // pred_check_branch
      %112 = sbr.rel (%p109) target = $region24
    $region23: #{patch_embed.1} parent=5 // pred_region
      %s113 = ssub.s32 %s7, 1
      %s114 = smul.u32 2, %s17
      %p115 = scmp.lt.s32.totalorder %s16, 1
      %s116 = scalar_select %p115, %s16, 1
      %p117 = scmp.lt.s32.totalorder %s114, 1
      %s118 = scalar_select %p117, %s114, 1
      %s119 = smul.addr %s116, 8
      %s120 = sadd.s32 %s118, %s119
      %s121 = smul.addr %s120, 8
      %s122 = scalar_lea.vmem %s0, %s121
      %p123 = pneg %p47
      %p124 = pneg %p44
      %p125 = pneg %p75
      %p126 = pneg %p72
      %s127 = smul.u32 32, %s17
      %p128 = scmp.lt.s32.totalorder %s16, 1
      %s129 = scalar_select %p128, %s16, 1
      %p130 = scmp.lt.s32.totalorder %s127, 31
      %s131 = scalar_select %p130, %s127, 31
      %s132 = smul.addr %s129, 32
      %s133 = sadd.s32 %s131, %s132
      %s134 = smul.addr %s133, 8
      %s135 = scalar_lea.vmem %s1, %s134
      %s136 = smul.u32 2, %s17
      %p137 = scmp.lt.s32.totalorder %s16, 1
      %s138 = scalar_select %p137, %s16, 1
      %p139 = scmp.lt.s32.totalorder %s136, 1
      %s140 = scalar_select %p139, %s136, 1
      %s141 = smul.addr %s138, 8
      %s142 = sadd.s32 %s140, %s141
      %s143 = smul.addr %s142, 8
      %s144 = scalar_lea.vmem %s0, %s143
      %s145 = smul.u32 2, %s17
      %s146 = smul.u32 32, %s17
      %p147 = scmp.lt.s32.totalorder %s16, 1
      %s148 = scalar_select %p147, %s16, 1
      %p149 = scmp.lt.s32.totalorder %s146, 31
      %s150 = scalar_select %p149, %s146, 31
      %s151 = smul.addr %s148, 32
      %s152 = sadd.s32 %s150, %s151
      %s153 = smul.addr %s152, 8
      %s154 = scalar_lea.vmem %s1, %s153
      %s155 = smul.u32 32, %s17
      %v156 = vld [vmem:[%s144] sm:$0xff]
      %v157 = vld [vmem:[%s144 + $0x8] sm:$0xff]
      %v158 = vld [vmem:[%s144 + $0x10] sm:$0xff]
      %v159 = vld [vmem:[%s144 + $0x18] sm:$0xff]
      %v160 = vld [vmem:[%s144 + $0x20] sm:$0xff]
      %v161 = vld [vmem:[%s144 + $0x28] sm:$0xff]
      %v162 = vld [vmem:[%s144 + $0x30] sm:$0xff]
      %v163 = vld [vmem:[%s144 + $0x38] sm:$0xff]
      %164 = vxpose.xlu0.b32.start [1/16] %v156, 128
      %165 = vxpose.xlu0.b32.cont [2/16] %v158, 128
      %166 = vxpose.xlu0.b32.cont [3/16] %v160, 128
      %167 = vxpose.xlu0.b32.cont [4/16] %v162, 128
      %168 = vxpose.xlu0.b32.cont [5/16] 0.0, 128
      %169 = vxpose.xlu0.b32.cont [6/16] 0.0, 128
      %170 = vxpose.xlu0.b32.cont [7/16] 0.0, 128
      %171 = vxpose.xlu0.b32.cont [8/16] 0.0, 128
      %172 = vxpose.xlu0.b32.cont [9/16] 0.0, 128
      %173 = vxpose.xlu0.b32.cont [10/16] 0.0, 128
      %174 = vxpose.xlu0.b32.cont [11/16] 0.0, 128
      %175 = vxpose.xlu0.b32.cont [12/16] 0.0, 128
      %176 = vxpose.xlu0.b32.cont [13/16] 0.0, 128
      %177 = vxpose.xlu0.b32.cont [14/16] 0.0, 128
      %178 = vxpose.xlu0.b32.cont [15/16] 0.0, 128
      %179 = vxpose.xlu0.b32.end [16/16] 0.0, 128
      %v180 = vpop.trf.xlu0
      %v181 = vpop.trf.xlu0
      %v182 = vpop.trf.xlu0
      %v183 = vpop.trf.xlu0
      %v184 = vpop.trf.xlu0
      %v185 = vpop.trf.xlu0
      %v186 = vpop.trf.xlu0
      %v187 = vpop.trf.xlu0
      %v188 = vpop.trf.xlu0
      %v189 = vpop.trf.xlu0
      %v190 = vpop.trf.xlu0
      %v191 = vpop.trf.xlu0
      %v192 = vpop.trf.xlu0
      %v193 = vpop.trf.xlu0
      %v194 = vpop.trf.xlu0
      %v195 = vpop.trf.xlu0
      %196 = vxpose.xlu0.b32.start [1/16] %v157, 128
      %197 = vxpose.xlu0.b32.cont [2/16] %v159, 128
      %198 = vxpose.xlu0.b32.cont [3/16] %v161, 128
      %199 = vxpose.xlu0.b32.cont [4/16] %v163, 128
      %200 = vxpose.xlu0.b32.cont [5/16] 0.0, 128
      %201 = vxpose.xlu0.b32.cont [6/16] 0.0, 128
      %202 = vxpose.xlu0.b32.cont [7/16] 0.0, 128
      %203 = vxpose.xlu0.b32.cont [8/16] 0.0, 128
      %204 = vxpose.xlu0.b32.cont [9/16] 0.0, 128
      %205 = vxpose.xlu0.b32.cont [10/16] 0.0, 128
      %206 = vxpose.xlu0.b32.cont [11/16] 0.0, 128
      %207 = vxpose.xlu0.b32.cont [12/16] 0.0, 128
      %208 = vxpose.xlu0.b32.cont [13/16] 0.0, 128
      %209 = vxpose.xlu0.b32.cont [14/16] 0.0, 128
      %210 = vxpose.xlu0.b32.cont [15/16] 0.0, 128
      %211 = vxpose.xlu0.b32.end [16/16] 0.0, 128
      %v212 = vpop.trf.xlu0
      %v213 = vpop.trf.xlu0
      %v214 = vpop.trf.xlu0
      %v215 = vpop.trf.xlu0
      %v216 = vpop.trf.xlu0
      %v217 = vpop.trf.xlu0
      %v218 = vpop.trf.xlu0
      %v219 = vpop.trf.xlu0
      %v220 = vpop.trf.xlu0
      %v221 = vpop.trf.xlu0
      %v222 = vpop.trf.xlu0
      %v223 = vpop.trf.xlu0
      %v224 = vpop.trf.xlu0
      %v225 = vpop.trf.xlu0
      %v226 = vpop.trf.xlu0
      %v227 = vpop.trf.xlu0
      %vm228 = vcmask 261120
      %229 = vst.msk [vmem:[%s154] sm:$0xff] %vm228, %v180
      %230 = vst.msk [vmem:[%s154 + $0x8] sm:$0xff] %vm228, %v181
      %231 = vst.msk [vmem:[%s154 + $0x10] sm:$0xff] %vm228, %v182
      %232 = vst.msk [vmem:[%s154 + $0x18] sm:$0xff] %vm228, %v183
      %233 = vst.msk [vmem:[%s154 + $0x20] sm:$0xff] %vm228, %v184
      %234 = vst.msk [vmem:[%s154 + $0x28] sm:$0xff] %vm228, %v185
      %235 = vst.msk [vmem:[%s154 + $0x30] sm:$0xff] %vm228, %v186
      %236 = vst.msk [vmem:[%s154 + $0x38] sm:$0xff] %vm228, %v187
      %237 = vst.msk [vmem:[%s154 + $0x40] sm:$0xff] %vm228, %v188
      %238 = vst.msk [vmem:[%s154 + $0x48] sm:$0xff] %vm228, %v189
      %239 = vst.msk [vmem:[%s154 + $0x50] sm:$0xff] %vm228, %v190
      %240 = vst.msk [vmem:[%s154 + $0x58] sm:$0xff] %vm228, %v191
      %241 = vst.msk [vmem:[%s154 + $0x60] sm:$0xff] %vm228, %v192
      %242 = vst.msk [vmem:[%s154 + $0x68] sm:$0xff] %vm228, %v193
      %243 = vst.msk [vmem:[%s154 + $0x70] sm:$0xff] %vm228, %v194
      %244 = vst.msk [vmem:[%s154 + $0x78] sm:$0xff] %vm228, %v195
      %245 = vst.msk [vmem:[%s154 + $0x80] sm:$0xff] %vm228, %v212
      %246 = vst.msk [vmem:[%s154 + $0x88] sm:$0xff] %vm228, %v213
      %247 = vst.msk [vmem:[%s154 + $0x90] sm:$0xff] %vm228, %v214
      %248 = vst.msk [vmem:[%s154 + $0x98] sm:$0xff] %vm228, %v215
      %249 = vst.msk [vmem:[%s154 + $0xa0] sm:$0xff] %vm228, %v216
      %250 = vst.msk [vmem:[%s154 + $0xa8] sm:$0xff] %vm228, %v217
      %251 = vst.msk [vmem:[%s154 + $0xb0] sm:$0xff] %vm228, %v218
      %252 = vst.msk [vmem:[%s154 + $0xb8] sm:$0xff] %vm228, %v219
      %253 = vst.msk [vmem:[%s154 + $0xc0] sm:$0xff] %vm228, %v220
      %254 = vst.msk [vmem:[%s154 + $0xc8] sm:$0xff] %vm228, %v221
      %255 = vst.msk [vmem:[%s154 + $0xd0] sm:$0xff] %vm228, %v222
      %256 = vst.msk [vmem:[%s154 + $0xd8] sm:$0xff] %vm228, %v223
      %257 = vst.msk [vmem:[%s154 + $0xe0] sm:$0xff] %vm228, %v224
      %258 = vst.msk [vmem:[%s154 + $0xe8] sm:$0xff] %vm228, %v225
      %259 = vst.msk [vmem:[%s154 + $0xf0] sm:$0xff] %vm228, %v226
      %260 = vst.msk [vmem:[%s154 + $0xf8] sm:$0xff] %vm228, %v227
      %s261 = smul.u32 32, %s17
      %p262 = scmp.lt.s32.totalorder %s16, 1
      %s263 = scalar_select %p262, %s16, 1
      %p264 = scmp.lt.s32.totalorder %s261, 31
      %s265 = scalar_select %p264, %s261, 31
      %s266 = smul.addr %s263, 32
      %s267 = sadd.s32 %s265, %s266
      %s268 = smul.addr %s267, 8
      %s269 = scalar_lea.vmem %s1, %s268
      // Predicated region
      $region25: #{patch_embed.1} parent=23 // pred_check
        %p270 = pneg %p72
      $region26: #{patch_embed.1} parent=23 // pred_check_branch
        %272 = sbr.rel (%p270) target = $region28
      $region27: #{patch_embed.1} parent=23 // pred_region
        %s273 = smul.u32 32, %s17
      $region28: #{patch_embed.1} parent=23 // pred_fallthru
        _
    $region24: #{patch_embed.1} parent=5 // pred_fallthru
      _
    %p274 = scmp.le.s32.totalorder 2, %s7
    // Predicated region
    $region29: #{patch_embed.1} parent=5 // pred_check
      %p275 = pneg %p274
    $region30: #{patch_embed.1} parent=5 // pred_check_branch
      %277 = sbr.rel (%p275) target = $region32
    $region31: #{patch_embed.1} parent=5 // pred_region
      %s278 = ssub.s32 %s7, 2
      // Predicated region
      $region33: #{patch_embed.1} parent=31 // pred_check
        %p279 = pneg %p78
      $region34: #{patch_embed.1} parent=31 // pred_check_branch
        %281 = sbr.rel (%p279) target = $region36
      $region35: #{patch_embed.1} parent=31 // pred_region
        %s282 = smul.u32 32, %s19
        %p283 = scmp.lt.s32.totalorder %s18, 1
        %s284 = scalar_select %p283, %s18, 1
        %p285 = scmp.lt.s32.totalorder %s282, 31
        %s286 = scalar_select %p285, %s282, 31
        %s287 = smul.addr %s284, 32
        %s288 = sadd.s32 %s286, %s287
        %s289 = smul.addr %s288, 8
        %s290 = scalar_lea.vmem %s1, %s289
      $region36: #{patch_embed.1} parent=31 // pred_fallthru
        _
    $region32: #{patch_embed.1} parent=5 // pred_fallthru
      _
  $region6: #{patch_embed.1} parent=0 // loop_footer
    %s11 = sadd.s32 1, %s7
  $region7: #{patch_embed.1} parent=0 // loop_footer_branch
    %6 = sbr.rel target = $region3
  $region8: #{patch_embed.1} parent=0 // loop_exit
    _

</llo_original>
